<compile_context>
chip_gen: v5e
topology: v5e:2x2
jax: 0.10.0
libtpu: 0.0.40
codegen_flags: <defaults>
</compile_context>

<pallas_src>
import functools

import jax
import jax.numpy as jnp
import numpy as np
from jax import lax
from jax.experimental import pallas as pl
from jax.experimental.pallas import tpu as pltpu

_LANES = 128
_SUBLANES = 8


def _bce_sum_kernel(pred_ref, gt_ref, out_ref, *, n_valid, tile_r, total_padded):
    """Grid axis 0 tiles the flattened (rows, 128) slab; out_ref accumulates the loss sum."""
    k = pl.program_id(0)

    @pl.when(k == 0)
    def _():
        out_ref[...] = jnp.zeros_like(out_ref)

    # Native-dtype tiles come in from HBM; compute in f32 inside the kernel.
    x = pred_ref[...].astype(jnp.float32)                         # (tile_r, 128)
    # gt.long() truncates toward zero before being used as the BCE target.
    y = gt_ref[...].astype(jnp.int32).astype(jnp.float32)         # (tile_r, 128)

    # Numerically stable BCE-with-logits (one EUP exp + one EUP log per element).
    elem = jnp.maximum(x, 0.0) - x * y + jnp.log(1.0 + jnp.exp(-jnp.abs(x)))

    if n_valid < total_padded:
        # Padding only lives in the last tile; keep full tiles on the unmasked fast path.
        last = pl.num_programs(0) - 1

        @pl.when(k != last)
        def _():
            out_ref[...] += jnp.sum(elem, keepdims=True)

        @pl.when(k == last)
        def _():
            row = lax.broadcasted_iota(jnp.int32, elem.shape, 0)
            col = lax.broadcasted_iota(jnp.int32, elem.shape, 1)
            flat = (k * tile_r + row) * _LANES + col
            masked = jnp.where(flat < n_valid, elem, 0.0)
            out_ref[...] += jnp.sum(masked, keepdims=True)
    else:
        out_ref[...] += jnp.sum(elem, keepdims=True)              # (1, 1) resident accumulator


def visual_hint_loss_balanced_line(pred, gt):
    """Returns -BCEWithLogitsLoss(pred, gt.long()) as a scalar."""
    pred = jnp.asarray(pred)
    gt = jnp.asarray(gt)
    assert pred.shape == gt.shape, (pred.shape, gt.shape)
    total = int(np.prod(pred.shape))

    rows = pl.cdiv(total, _LANES)
    # Big lane-dense tiles amortize per-grid-step overhead; still tiny vs. VMEM
    # (2 inputs x 2 buffers x tile bytes <= a few MiB even at tile_r = 2048).
    max_tile_r = 2048
    tile_r = min(max_tile_r, ((rows + _SUBLANES - 1) // _SUBLANES) * _SUBLANES)
    rows_pad = ((rows + tile_r - 1) // tile_r) * tile_r
    total_pad = rows_pad * _LANES

    pred_flat = pred.reshape(-1)
    gt_flat = gt.reshape(-1)
    if total_pad != total:
        pred_flat = jnp.pad(pred_flat, (0, total_pad - total))
        gt_flat = jnp.pad(gt_flat, (0, total_pad - total))
    pred2d = pred_flat.reshape(rows_pad, _LANES)
    gt2d = gt_flat.reshape(rows_pad, _LANES)

    grid = (rows_pad // tile_r,)

    # Double-buffered input tiles + headroom; capped at 32 MiB so it is safe on v7x as well.
    tile_bytes = tile_r * _LANES * (pred2d.dtype.itemsize + gt2d.dtype.itemsize)
    vmem_limit = int(min(32 * 1024 * 1024, max(4 * 1024 * 1024, 4 * tile_bytes)))

    kernel = functools.partial(
        _bce_sum_kernel, n_valid=total, tile_r=tile_r, total_padded=total_pad)

    loss_sum = pl.pallas_call(
        kernel,
        out_shape=jax.ShapeDtypeStruct((1, 1), jnp.float32),
        grid_spec=pltpu.PrefetchScalarGridSpec(
            num_scalar_prefetch=0,
            grid=grid,
            in_specs=[
                pl.BlockSpec((tile_r, _LANES), lambda k: (k, 0)),   # pred tile
                pl.BlockSpec((tile_r, _LANES), lambda k: (k, 0)),   # gt tile
            ],
            out_specs=pl.BlockSpec((1, 1), lambda k: (0, 0)),       # resident accumulator
        ),
        compiler_params=pltpu.CompilerParams(
            dimension_semantics=("arbitrary",),
            vmem_limit_bytes=vmem_limit,
        ),
    )(pred2d, gt2d)

    mean_loss = loss_sum[0, 0] / jnp.float32(total)
    return -mean_loss


def _reference(pred, gt):
    """Pure-JAX reference mirroring the PyTorch forward (-BCEWithLogitsLoss)."""
    x = jnp.asarray(pred).astype(jnp.float32)
    y = jnp.asarray(gt).astype(jnp.int32).astype(jnp.float32)
    elem = jnp.maximum(x, 0.0) - x * y + jnp.log(1.0 + jnp.exp(-jnp.abs(x)))
    return -jnp.mean(elem)


if __name__ == "__main__":
    key = jax.random.PRNGKey(0)
    k1, k2, k3, k4 = jax.random.split(key, 4)

    # Main case: (B, C, H, W) = (2, 4, 16, 16), f32 logits, binary targets.
    B, C, H, W = 2, 4, 16, 16
    pred = jax.random.normal(k1, (B, C, H, W), dtype=jnp.float32)
    gt = jax.random.bernoulli(k2, 0.3, (B, C, H, W)).astype(jnp.float32)

    out = visual_hint_loss_balanced_line(pred, gt)
    out = jax.block_until_ready(out)
    ref = _reference(pred, gt)
    np.testing.assert_allclose(np.asarray(out), np.asarray(ref), rtol=1e-5, atol=1e-6)

    # Secondary case: bf16 logits (native-dtype HBM traffic) and a size that is not a
    # multiple of 128, exercising the last-tile padding-mask path.
    pred2 = jax.random.normal(k3, (2, 1, 9, 13), dtype=jnp.bfloat16)
    gt2 = jax.random.bernoulli(k4, 0.5, (2, 1, 9, 13)).astype(jnp.float32)

    out2 = visual_hint_loss_balanced_line(pred2, gt2)
    out2 = jax.block_until_ready(out2)
    ref2 = _reference(pred2, gt2)
    np.testing.assert_allclose(np.asarray(out2), np.asarray(ref2), rtol=1e-5, atol=1e-6)

    print("KERNEL_OK")
</pallas_src>

<mosaic_0001>
module attributes {stable_mosaic.version = 11 : i64} {
  func.func @_bce_sum_kernel(%arg0: i32, %arg1: memref<16x128xf32, #tpu.memory_space<vmem>>, %arg2: memref<16x128xf32, #tpu.memory_space<vmem>>, %arg3: memref<1x1xf32, #tpu.memory_space<vmem>>) attributes {dimension_semantics = [#tpu.dimension_semantics<arbitrary>], iteration_bounds = array<i64: 1>, scalar_prefetch = 0 : i64, scratch_operands = 0 : i64, tpu.core_type = #tpu.core_type<tc>, window_params = [{transform_indices = @transform_0, window_bounds = array<i64: 16, 128>}, {transform_indices = @transform_1, window_bounds = array<i64: 16, 128>}, {pipeline_mode = #tpu.pipeline_mode<synchronous>, transform_indices = @transform_2, window_bounds = array<i64: 1, 1>}]} {
    %c0_i32 = arith.constant 0 : i32
    %0 = arith.cmpi eq, %arg0, %c0_i32 : i32
    %1 = arith.extui %0 : i1 to i32
    %c0_i32_0 = arith.constant 0 : i32
    %2 = arith.cmpi ne, %1, %c0_i32_0 : i32
    scf.if %2 {
      %cst_11 = arith.constant 0.000000e+00 : f32
      %27 = vector.broadcast %cst_11 : f32 to vector<1x1xf32>
      %c0_12 = arith.constant 0 : index
      %c0_13 = arith.constant 0 : index
      %28 = vector.load %arg3[%c0_12, %c0_13] : memref<1x1xf32, #tpu.memory_space<vmem>>, vector<1x1xf32>
      tpu.vector_store %arg3[%c0_12, %c0_13], %27 {strides = array<i32>} : memref<1x1xf32, #tpu.memory_space<vmem>>, vector<1x1xf32>,
    } else {
    }
    %c0 = arith.constant 0 : index
    %c0_1 = arith.constant 0 : index
    %3 = vector.load %arg1[%c0, %c0_1] : memref<16x128xf32, #tpu.memory_space<vmem>>, vector<16x128xf32>
    %c0_2 = arith.constant 0 : index
    %c0_3 = arith.constant 0 : index
    %4 = vector.load %arg2[%c0_2, %c0_3] : memref<16x128xf32, #tpu.memory_space<vmem>>, vector<16x128xf32>
    %5 = arith.fptosi %4 : vector<16x128xf32> to vector<16x128xi32>
    %6 = arith.sitofp %5 : vector<16x128xi32> to vector<16x128xf32>
    %cst = arith.constant 0.000000e+00 : f32
    %7 = vector.broadcast %cst : f32 to vector<16x128xf32>
    %8 = arith.maximumf %3, %7 : vector<16x128xf32>
    %9 = arith.mulf %3, %6 : vector<16x128xf32>
    %10 = arith.subf %8, %9 : vector<16x128xf32>
    %11 = math.absf %3 : vector<16x128xf32>
    %cst_4 = arith.constant 0.000000e+00 : f32
    %12 = vector.broadcast %cst_4 : f32 to vector<16x128xf32>
    %13 = arith.subf %12, %11 : vector<16x128xf32>
    %14 = math.exp %13 : vector<16x128xf32>
    %cst_5 = arith.constant 1.000000e+00 : f32
    %15 = vector.broadcast %cst_5 : f32 to vector<16x128xf32>
    %16 = arith.addf %15, %14 : vector<16x128xf32>
    %17 = math.log %16 : vector<16x128xf32>
    %18 = arith.addf %10, %17 : vector<16x128xf32>
    %c0_6 = arith.constant 0 : index
    %c0_7 = arith.constant 0 : index
    %19 = vector.load %arg3[%c0_6, %c0_7] : memref<1x1xf32, #tpu.memory_space<vmem>>, vector<1x1xf32>
    %20 = vector.shape_cast %18 : vector<16x128xf32> to vector<1x16x128xf32>
    %cst_8 = arith.constant dense<0.000000e+00> : vector<1xf32>
    %21 = vector.multi_reduction <add>, %20, %cst_8 [1, 2] : vector<1x16x128xf32> to vector<1xf32>
    %22 = vector.shape_cast %21 : vector<1xf32> to vector<1x1x1xf32>
    %23 = vector.extract %22[0, 0, 0] : f32 from vector<1x1x1xf32>
    %24 = vector.broadcast %23 : f32 to vector<1x1xf32>
    %25 = arith.addf %19, %24 : vector<1x1xf32>
    %c0_9 = arith.constant 0 : index
    %c0_10 = arith.constant 0 : index
    %26 = vector.load %arg3[%c0_9, %c0_10] : memref<1x1xf32, #tpu.memory_space<vmem>>, vector<1x1xf32>
    tpu.vector_store %arg3[%c0_9, %c0_10], %25 {strides = array<i32>} : memref<1x1xf32, #tpu.memory_space<vmem>>, vector<1x1xf32>,
    return
  }
  func.func @transform_0(%arg0: i32) -> (i32, i32) {
    %c0_i32 = arith.constant 0 : i32
    %c0_i32_0 = arith.constant 0 : i32
    return %arg0, %c0_i32 : i32, i32
  }
  func.func @transform_1(%arg0: i32) -> (i32, i32) {
    %c0_i32 = arith.constant 0 : i32
    %c0_i32_0 = arith.constant 0 : i32
    return %arg0, %c0_i32 : i32, i32
  }
  func.func @transform_2(%arg0: i32) -> (i32, i32) {
    %c0_i32 = arith.constant 0 : i32
    %c0_i32_0 = arith.constant 0 : i32
    %c0_i32_1 = arith.constant 0 : i32
    return %c0_i32, %c0_i32_0 : i32, i32
  }
}

</mosaic_0001>

<llo_original>
// kernel: tpu_custom_call.1
$region0: #{tpu_custom_call.1}
  #allocation0 [shape = 'u32[]', space=smem, size = 0x4, offset = 0x4, fixed_abs, tag = 'smem constant byte address 0x4 - core index']
  #allocation1 [shape = 'u32[72,128]{1,0:T(1,128)}', space=vmem, size = 0x9000, scoped, tag = 'internal scratch']
  %s0 = inlined_call_operand.hbm [shape: f32[16,128], index: 0, kind: input, shape index: {}]
  %s1 = inlined_call_operand.hbm [shape: f32[16,128], index: 1, kind: input, shape index: {}]
  %s2 = inlined_call_operand.hbm [shape: f32[1,1], index: 2, kind: output, shape index: {}]
  %s3 = sld [smem:[#allocation0]]
  $region30: #{tpu_custom_call.1} parent=0
    _
  %s5 = ssub.s32 1, %s3
  %s6 = scalar_select 0, %s5, %s3
  $region1: #{tpu_custom_call.1} parent=0
    #allocation2 [shape = 'u8[8192]{0}', space=vmem, size = 0x2000, scoped, tag = 'input window, operand 0, single buffered']
    #allocation3 [shape = 's32[1]{0}', space=sflag, size = 0x4, scoped, tag = 'scoped memory for tpu_custom_call.1']
    #allocation4 [shape = 's32[1]{0}', space=sflag, size = 0x4, scoped, tag = 'scoped memory for tpu_custom_call.1']
    #allocation5 [shape = 'u8[8192]{0}', space=vmem, size = 0x2000, scoped, tag = 'input window, operand 1, single buffered']
    #allocation6 [shape = 's32[1]{0}', space=sflag, size = 0x4, scoped, tag = 'scoped memory for tpu_custom_call.1']
    #allocation7 [shape = 'u8[512]{0}', space=vmem, size = 0x400, scoped, tag = 'output window, operand 0, single buffered']
    %7 = vsyncpa [#allocation3], 0
    %8 = vsyncpa [#allocation6], 0
    %9 = vsyncpa [#allocation4], 0
    // Predicated region
    $region2: #{tpu_custom_call.1} parent=1 // pred_check
      _
    $region3: #{tpu_custom_call.1} parent=1 // pred_check_branch
      %11 = sbr.rel (0) target = $region5
    $region4: #{tpu_custom_call.1} parent=1 // pred_region
      %13 = vsyncadd [#allocation3], 0
      %s14 = sshll.u32 %s0, 4
      %s15 = int_to_ptr.hbm [resolvable:$true] %s14
      %s16 = sshll.u32 [#allocation2], 4
      %s17 = int_to_ptr.vmem [resolvable:$true] %s16
      %22 = dma.hbm_to_vmem [thread:$0]  %s15, 256, %s17, [#allocation3], 128, 128, 8
    $region5: #{tpu_custom_call.1} parent=1 // pred_fallthru
      _
    // Predicated region
    $region6: #{tpu_custom_call.1} parent=1 // pred_check
      _
    $region7: #{tpu_custom_call.1} parent=1 // pred_check_branch
      %24 = sbr.rel (0) target = $region9
    $region8: #{tpu_custom_call.1} parent=1 // pred_region
      %26 = vsyncadd [#allocation6], 0
      %s27 = sshll.u32 %s1, 4
      %s28 = int_to_ptr.hbm [resolvable:$true] %s27
      %s29 = sshll.u32 [#allocation5], 4
      %s30 = int_to_ptr.vmem [resolvable:$true] %s29
      %35 = dma.hbm_to_vmem [thread:$0]  %s28, 256, %s30, [#allocation6], 128, 128, 8
    $region9: #{tpu_custom_call.1} parent=1 // pred_fallthru
      _
    // Predicated region
    $region10: #{tpu_custom_call.1} parent=1 // pred_check
      _
    $region11: #{tpu_custom_call.1} parent=1 // pred_check_branch
      %37 = sbr.rel (0) target = $region13
    $region12: #{tpu_custom_call.1} parent=1 // pred_region
      %39 = dma.done [#allocation3], 256
    $region13: #{tpu_custom_call.1} parent=1 // pred_fallthru
      _
    // Predicated region
    $region14: #{tpu_custom_call.1} parent=1 // pred_check
      _
    $region15: #{tpu_custom_call.1} parent=1 // pred_check_branch
      %41 = sbr.rel (0) target = $region17
    $region16: #{tpu_custom_call.1} parent=1 // pred_region
      %43 = dma.done [#allocation6], 256
    $region17: #{tpu_custom_call.1} parent=1 // pred_fallthru
      _
    %p44 = scmp.eq.s32.totalorder 0, 0
    // Predicated region
    $region18: #{tpu_custom_call.1} parent=1 // pred_check
      %p45 = pneg %p44
    $region19: #{tpu_custom_call.1} parent=1 // pred_check_branch
      %47 = sbr.rel (%p45) target = $region21
    $region20: #{tpu_custom_call.1} parent=1 // pred_region
      %vm48 = vcmask 0
      %49 = vst.msk [vmem:[#allocation7] sm:$0x1] %vm48, 0.0
    $region21: #{tpu_custom_call.1} parent=1 // pred_fallthru
      _
    %v50 = vld [vmem:[#allocation2] sm:$0xff]
    %v51 = vld [vmem:[#allocation2 + $0x8] sm:$0xff]
    %v52 = vld [vmem:[#allocation5] sm:$0xff]
    %v53 = vld [vmem:[#allocation5 + $0x8] sm:$0xff]
    %v54 = vcvt.f32.s32.to.zero.pseudo %v52
    %v55 = vcvt.f32.s32.to.zero.pseudo %v53
    %v56 = vcvt.s32.f32 %v54
    %v57 = vcvt.s32.f32 %v55
    %v58 = vmax.f32 %v50, 0.0
    %v59 = vmax.f32 %v51, 0.0
    %v60 = vmul.f32 %v50, %v56
    %v61 = vmul.f32 %v51, %v57
    %v62 = vsub.f32 %v58, %v60
    %v63 = vsub.f32 %v59, %v61
    %v64 = vand.u32 2147483647, %v50
    %v65 = vand.u32 2147483647, %v51
    %v66 = vsub.f32 0.0, %v64
    %v67 = vsub.f32 0.0, %v65
    %v68 = vmul.f32 %v66, 1.442695
    %v69 = vpow.pop %v68
    %v70 = vmul.f32 %v67, 1.442695
    %v71 = vpow.pop %v70
    %v72 = vadd.f32 %v69, 1.0
    %v73 = vadd.f32 %v71, 1.0
    %v74 = vlog2.pop %v72
    %v75 = vmul.f32 %v74, 0.6931472
    %v76 = vlog2.pop %v73
    %v77 = vmul.f32 %v76, 0.6931472
    %v78 = vadd.f32 %v62, %v75
    %v79 = vadd.f32 %v63, %v77
    %v80 = vld [vmem:[#allocation7] sm:$0x1]
    %v81 = vadd.f32 %v78, %v79
    %82 = vadd.xlane.f32.xlu0 %v81
    %v83 = vpop.xlane.xlu0 %82
    %v84 = vrot.slane %v83, 4
    %v85 = vadd.f32 %v83, %v84
    %v86 = vrot.slane %v85, 2
    %v87 = vadd.f32 %v85, %v86
    %v88 = vrot.slane %v87, 1
    %v89 = vadd.f32 %v87, %v88
    %s90 = vtos %v89
    %v91 = vstv %s90
    %v92 = vadd.f32 %v80, %v91
    %vm93 = vcmask 0
    %94 = vst.msk [vmem:[#allocation7] sm:$0x1] %vm93, %v92
    // Predicated region
    $region22: #{tpu_custom_call.1} parent=1 // pred_check
      _
    $region23: #{tpu_custom_call.1} parent=1 // pred_check_branch
      %96 = sbr.rel (0) target = $region25
    $region24: #{tpu_custom_call.1} parent=1 // pred_region
      %98 = vsyncadd [#allocation4], 0
      %s100 = sshll.u32 [#allocation7], 4
      %s101 = int_to_ptr.vmem [resolvable:$true] %s100
      %s102 = sshll.u32 %s2, 4
      %s103 = int_to_ptr.hbm [resolvable:$true] %s102
      %105 = dma.vmem_to_hbm [thread:$0]  %s101, 16, %s103, [#allocation4]
    $region25: #{tpu_custom_call.1} parent=1 // pred_fallthru
      _
    // Predicated region
    $region26: #{tpu_custom_call.1} parent=1 // pred_check
      _
    $region27: #{tpu_custom_call.1} parent=1 // pred_check_branch
      %107 = sbr.rel (0) target = $region29
    $region28: #{tpu_custom_call.1} parent=1 // pred_region
      %109 = dma.done [#allocation4], 16
    $region29: #{tpu_custom_call.1} parent=1 // pred_fallthru
      _
    %110 = vsyncpa [#allocation3], 1
    %111 = vsyncpa [#allocation6], 1
    %112 = vsyncpa [#allocation4], 1

</llo_original>
